<compile_context>
chip_gen: v7x
topology: tpu7x:2x2x1
jax: 0.10.0
libtpu: 0.0.40
codegen_flags: <defaults>
</compile_context>

<pallas_src>
import functools

import jax
import jax.numpy as jnp
from jax.experimental import pallas as pl
from jax.experimental.pallas import tpu as pltpu


def _round_up(x, m):
    return (x + m - 1) // m * m


# ----------------------------------------------------------------------------
# Generic row-tiled linear kernel:  y = x @ w_t + b   (bf16 operands, f32 acc)
# ----------------------------------------------------------------------------
def _linear_kernel(x_ref, w_ref, b_ref, o_ref):
    o_ref[...] = (
        jnp.dot(x_ref[...], w_ref[...], preferred_element_type=jnp.float32)
        + b_ref[...]
    ).astype(o_ref.dtype)


def linear(x2d, w_t, b, *, tm_max=512):
    """x2d: (M, K) f32, w_t: (K, N) pre-transposed torch weight, b: (N,)."""
    M, K = x2d.shape
    Kw, N = w_t.shape
    assert Kw == K

    # Lane-dense output: pad N up to a multiple of 128 so stores are unmasked.
    Np = _round_up(N, 128)
    if Np != N:
        w_t = jnp.pad(w_t, ((0, 0), (0, Np - N)))
        b = jnp.pad(b, (0, Np - N))

    # Large, sublane-aligned row tiles; pad M so the tile divides evenly.
    tm = min(_round_up(M, 8), tm_max)
    Mp = _round_up(M, tm)
    if Mp != M:
        x2d = jnp.pad(x2d, ((0, Mp - M), (0, 0)))

    out = pl.pallas_call(
        _linear_kernel,
        out_shape=jax.ShapeDtypeStruct((Mp, Np), jnp.float32),
        grid=(Mp // tm,),
        in_specs=[
            pl.BlockSpec((tm, K), lambda i: (i, 0)),
            pl.BlockSpec((K, Np), lambda i: (0, 0)),
            pl.BlockSpec((1, Np), lambda i: (0, 0)),
        ],
        out_specs=pl.BlockSpec((tm, Np), lambda i: (i, 0)),
        compiler_params=pltpu.CompilerParams(dimension_semantics=("parallel",)),
    )(x2d.astype(jnp.bfloat16), w_t.astype(jnp.bfloat16),
      b.reshape(1, Np).astype(jnp.float32))
    return out[:M, :N]


# ----------------------------------------------------------------------------
# Encoder stack kernel: one grid step = one TransformerEncoderLayer
# (post-norm, ReLU FFN, eval-mode dropout).  Activations (S*N, D) carried in a
# persistent VMEM scratch; per-layer weights streamed via the layer grid axis.
# ----------------------------------------------------------------------------
def _encoder_stack_kernel(
    x_ref, seg_ref, segT_ref,
    wq_ref, bq_ref, wk_ref, bk_ref, wv_ref, bv_ref,
    wo_ref, bo_ref, ln1g_ref, ln1b_ref,
    w1_ref, b1_ref, w2_ref, b2_ref, ln2g_ref, ln2b_ref,
    o_ref, act_ref, *, S, N, H,
):
    layer = pl.program_id(0)
    n_layers = pl.num_programs(0)
    M, D = act_ref.shape
    Dh = D // H
    scale = 1.0 / float(Dh) ** 0.5
    eps = 1e-5

    @pl.when(layer == 0)
    def _():
        act_ref[...] = x_ref[...]

    x = act_ref[...]                                   # (M, D) f32 residual
    x16 = x.astype(jnp.bfloat16)

    def proj(w_ref, b_ref):
        return jnp.dot(x16, w_ref[...], preferred_element_type=jnp.float32) + b_ref[...]

    # --- full-width Q/K/V projections (MXU, D-wide contraction) -------------
    q = proj(wq_ref, bq_ref) * scale                   # (M, D)
    k = proj(wk_ref, bk_ref)                           # (M, D)
    v = proj(wv_ref, bv_ref)                           # (M, D)

    seg = seg_ref[...]                                 # (D, Hp) block one-hot (lane-padded heads)
    segT = segT_ref[...]                               # (Hp, D)

    # --- multi-head self-attention over the S axis (rows grouped s-major) ---
    # Per-head score reduction is an MXU matmul against the segment matrix;
    # padded head columns produce scores == 0 and are zeroed again by segT.
    ctx_rows = []
    for s in range(S):
        q_s = q[s * N:(s + 1) * N, :]                  # (N, D)
        scs = []
        for t in range(S):
            k_t = k[t * N:(t + 1) * N, :]
            prod = (q_s * k_t).astype(jnp.bfloat16)    # (N, D)
            scs.append(jnp.dot(prod, seg, preferred_element_type=jnp.float32))  # (N, Hp)
        m = scs[0]
        for t in range(1, S):
            m = jnp.maximum(m, scs[t])
        es = [jnp.exp(c - m) for c in scs]
        den = es[0]
        for t in range(1, S):
            den = den + es[t]
        inv = pl.reciprocal(den, approx=True)          # (N, Hp)  EUP slot
        ctx = None
        for t in range(S):
            w_exp = jnp.dot((es[t] * inv).astype(jnp.bfloat16), segT,
                            preferred_element_type=jnp.float32)   # (N, D)
            term = w_exp * v[t * N:(t + 1) * N, :]
            ctx = term if ctx is None else ctx + term
        ctx_rows.append(ctx)
    ctx_all = ctx_rows[0] if S == 1 else jnp.concatenate(ctx_rows, axis=0)   # (M, D)

    # --- output projection (single full-D matmul over all heads) ------------
    attn_out = (jnp.dot(ctx_all.astype(jnp.bfloat16), wo_ref[...],
                        preferred_element_type=jnp.float32) + bo_ref[...])

    def layer_norm(y, g_ref, b_ref):
        mu = jnp.mean(y, axis=-1, keepdims=True)
        var = jnp.mean((y - mu) ** 2, axis=-1, keepdims=True)
        return (y - mu) * jax.lax.rsqrt(var + eps) * g_ref[...] + b_ref[...]

    # --- residual + LN1 + FFN + residual + LN2 on the flat (S*N, D) slab ----
    y = layer_norm(x + attn_out, ln1g_ref, ln1b_ref)

    h1 = jnp.maximum(
        jnp.dot(y.astype(jnp.bfloat16), w1_ref[...],
                preferred_element_type=jnp.float32) + b1_ref[...], 0.0)
    ff = (jnp.dot(h1.astype(jnp.bfloat16), w2_ref[...],
                  preferred_element_type=jnp.float32) + b2_ref[...])
    out = layer_norm(y + ff, ln2g_ref, ln2b_ref)

    act_ref[...] = out

    @pl.when(layer == n_layers - 1)
    def _():
        o_ref[...] = out.astype(o_ref.dtype)


def _const_spec(shape):
    nd = len(shape)
    return pl.BlockSpec(tuple(shape), lambda l: (0,) * nd)


def _layer_spec(shape):
    nd = len(shape)
    return pl.BlockSpec((None,) + tuple(shape), lambda l: (l,) + (0,) * nd)


def encoder_stack(x_flat, enc, *, S, N, H):
    M, D = x_flat.shape
    n_layers = enc["wq"].shape[0]
    F = enc["w1"].shape[-1]
    Hp = enc["seg"].shape[-1]

    kernel = functools.partial(_encoder_stack_kernel, S=S, N=N, H=H)
    in_specs = [
        _const_spec((M, D)),                              # x
        _const_spec((D, Hp)),                             # seg
        _const_spec((Hp, D)),                             # segT
        _layer_spec((D, D)), _layer_spec((1, D)),         # wq, bq
        _layer_spec((D, D)), _layer_spec((1, D)),         # wk, bk
        _layer_spec((D, D)), _layer_spec((1, D)),         # wv, bv
        _layer_spec((D, D)), _layer_spec((1, D)),         # wo, bo
        _layer_spec((1, D)), _layer_spec((1, D)),         # ln1 gamma/beta
        _layer_spec((D, F)), _layer_spec((1, F)),         # w1, b1
        _layer_spec((F, D)), _layer_spec((1, D)),         # w2, b2
        _layer_spec((1, D)), _layer_spec((1, D)),         # ln2 gamma/beta
    ]
    return pl.pallas_call(
        kernel,
        out_shape=jax.ShapeDtypeStruct((M, D), jnp.float32),
        grid=(n_layers,),
        in_specs=in_specs,
        out_specs=_const_spec((M, D)),
        scratch_shapes=[pltpu.VMEM((M, D), jnp.float32)],
        compiler_params=pltpu.CompilerParams(
            dimension_semantics=("arbitrary",)),
    )(x_flat, enc["seg"], enc["segT"],
      enc["wq"], enc["bq"], enc["wk"], enc["bk"], enc["wv"], enc["bv"],
      enc["wo"], enc["bo"], enc["ln1g"], enc["ln1b"],
      enc["w1"], enc["b1"], enc["w2"], enc["b2"], enc["ln2g"], enc["ln2b"])


# ----------------------------------------------------------------------------
# Parameter initialization (deterministic, synthetic)
# ----------------------------------------------------------------------------
def _rand_linear(key, in_dim, out_dim, scale=0.05):
    kw, kb = jax.random.split(key)
    w_t = jax.random.normal(kw, (in_dim, out_dim), jnp.float32) * scale  # pre-transposed
    b = jax.random.normal(kb, (out_dim,), jnp.float32) * scale
    return w_t, b


def init_params(key, D_bert, D, H, F, n_layers, hidden_dim, caption_length, series_length):
    ks = jax.random.split(key, 3 + n_layers)
    emb_w_t, emb_b = _rand_linear(ks[0], D_bert, D)                      # self.embedding
    out_w_t, out_b = _rand_linear(ks[1], D, hidden_dim)                  # self.out_proj
    seq_w_t, seq_b = _rand_linear(ks[2], caption_length, series_length)  # self.sequence_projector

    def init_layer(k):
        kk = jax.random.split(k, 6)
        wq, bq = _rand_linear(kk[0], D, D)
        wk, bk = _rand_linear(kk[1], D, D)
        wv, bv = _rand_linear(kk[2], D, D)
        wo, bo = _rand_linear(kk[3], D, D)
        w1, b1 = _rand_linear(kk[4], D, F)
        w2, b2 = _rand_linear(kk[5], F, D)
        return dict(wq=wq, bq=bq, wk=wk, bk=bk, wv=wv, bv=bv, wo=wo, bo=bo,
                    w1=w1, b1=b1, w2=w2, b2=b2)

    layers = [init_layer(ks[3 + i]) for i in range(n_layers)]

    def stack_w(name):   # (n_layers, in, out) bf16 (halves DMA traffic / VMEM)
        return jnp.stack([l[name] for l in layers]).astype(jnp.bfloat16)

    def stack_b(name):   # (n_layers, 1, dim) f32
        return jnp.stack([l[name].reshape(1, -1) for l in layers])

    # Block one-hot "segment" matrix mapping feature -> head, lane-padded so all
    # attention intermediates are lane-dense (padded columns/rows are zero).
    Dh = D // H
    Hp = _round_up(H, 128)
    head_id = jnp.arange(D) // Dh
    seg = (head_id[:, None] == jnp.arange(Hp)[None, :]).astype(jnp.bfloat16)  # (D, Hp)

    enc = dict(
        wq=stack_w("wq"), bq=stack_b("bq"),
        wk=stack_w("wk"), bk=stack_b("bk"),
        wv=stack_w("wv"), bv=stack_b("bv"),
        wo=stack_w("wo"), bo=stack_b("bo"),
        w1=stack_w("w1"), b1=stack_b("b1"),
        w2=stack_w("w2"), b2=stack_b("b2"),
        ln1g=jnp.ones((n_layers, 1, D), jnp.float32),
        ln1b=jnp.zeros((n_layers, 1, D), jnp.float32),
        ln2g=jnp.ones((n_layers, 1, D), jnp.float32),
        ln2b=jnp.zeros((n_layers, 1, D), jnp.float32),
        seg=seg, segT=seg.T,
    )
    # self.fc is defined in __init__ but never used in forward -> omitted.
    return dict(emb_w_t=emb_w_t, emb_b=emb_b, out_w_t=out_w_t, out_b=out_b,
                seq_w_t=seq_w_t, seq_b=seq_b, enc=enc, n_heads=H)


# ----------------------------------------------------------------------------
# Full forward pass (post-BERT portion of Transformer.forward)
# ----------------------------------------------------------------------------
def transformer_forward(text_embeddings, params):
    # TODO(synk): BertTokenizer/BertModel have no Pallas equivalent; the kernel
    # consumes the BERT last_hidden_state directly.
    B, L, D_bert = text_embeddings.shape
    D = params["emb_w_t"].shape[1]

    # embedded_text = self.embedding(text_embeddings)
    x = linear(text_embeddings.reshape(B * L, D_bert), params["emb_w_t"], params["emb_b"])

    # transformer_out = self.transformer(embedded_text)
    # batch_first=False default: attention over axis 0 (=B).  Row layout of the
    # flat (B*L, D) slab is s-major with S=B, N=L, matching the kernel.
    x = encoder_stack(x, params["enc"], S=B, N=L, H=params["n_heads"])

    # output_hidden = self.out_proj(transformer_out); dropout = identity (eval)
    hidden_dim = params["out_w_t"].shape[1]
    h = linear(x, params["out_w_t"], params["out_b"])            # (B*L, hidden)

    # output = self.sequence_projector(output_hidden.transpose(1, 2)); dropout = identity
    series_length = params["seq_w_t"].shape[1]
    ht = jnp.transpose(h.reshape(B, L, hidden_dim), (0, 2, 1)).reshape(B * hidden_dim, L)
    out = linear(ht, params["seq_w_t"], params["seq_b"]).reshape(B, hidden_dim, series_length)
    return out


if __name__ == "__main__":
    # Small, shape-consistent configuration (scaled-down module hyperparams).
    B = 2                 # batch
    caption_length = 16   # L (torch default 64)
    D_bert = 32           # BERT hidden size stand-in (torch: 768)
    D = 64                # text_embed_dim (torch: 512)
    n_heads = 4           # (torch: 16)
    n_layers = 2          # (torch: 19)
    dim_ff = 128          # TransformerEncoderLayer dim_feedforward (torch default: 2048)
    hidden_dim = 32       # (torch: 64)
    series_length = 8     # (torch: 12)

    key = jax.random.PRNGKey(0)
    k_in, k_par = jax.random.split(key)

    # Stand-in for bert(...).last_hidden_state
    text_embeddings = jax.random.normal(k_in, (B, caption_length, D_bert), jnp.float32)

    params = init_params(k_par, D_bert, D, n_heads, dim_ff, n_layers,
                         hidden_dim, caption_length, series_length)

    out = transformer_forward(text_embeddings, params)
    out = jax.block_until_ready(out)
    assert out.shape == (B, hidden_dim, series_length), out.shape
    assert bool(jnp.all(jnp.isfinite(out)))
    print("KERNEL_OK")
</pallas_src>

<mosaic_0001>
module attributes {stable_mosaic.version = 11 : i64} {
  func.func @_linear_kernel(%arg0: i32, %arg1: memref<32x32xbf16, #tpu.memory_space<vmem>>, %arg2: memref<32x128xbf16, #tpu.memory_space<vmem>>, %arg3: memref<1x128xf32, #tpu.memory_space<vmem>>, %arg4: memref<32x128xf32, #tpu.memory_space<vmem>>) attributes {dimension_semantics = [#tpu.dimension_semantics<parallel>], iteration_bounds = array<i64: 1>, scalar_prefetch = 0 : i64, scratch_operands = 0 : i64, tpu.core_type = #tpu.core_type<tc>, window_params = [{transform_indices = @transform_0, window_bounds = array<i64: 32, 32>}, {pipeline_mode = #tpu.pipeline_mode<synchronous>, transform_indices = @transform_1, window_bounds = array<i64: 32, 128>}, {pipeline_mode = #tpu.pipeline_mode<synchronous>, transform_indices = @transform_2, window_bounds = array<i64: 1, 128>}, {transform_indices = @transform_3, window_bounds = array<i64: 32, 128>}]} {
    %c0 = arith.constant 0 : index
    %c0_0 = arith.constant 0 : index
    %0 = vector.load %arg1[%c0, %c0_0] : memref<32x32xbf16, #tpu.memory_space<vmem>>, vector<32x32xbf16>
    %c0_1 = arith.constant 0 : index
    %c0_2 = arith.constant 0 : index
    %1 = vector.load %arg2[%c0_1, %c0_2] : memref<32x128xbf16, #tpu.memory_space<vmem>>, vector<32x128xbf16>
    %cst = arith.constant dense<0.000000e+00> : vector<32x128xf32>
    %2 = tpu.matmul %0, %1, %cst {dimension_numbers = #tpu.dot_dimension_numbers<[1], [0], [0], [1], [0, 0, 1, 1], [], []>} : vector<32x32xbf16>, vector<32x128xbf16>, vector<32x128xf32> -> vector<32x128xf32>
    %c0_3 = arith.constant 0 : index
    %c0_4 = arith.constant 0 : index
    %3 = vector.load %arg3[%c0_3, %c0_4] : memref<1x128xf32, #tpu.memory_space<vmem>>, vector<1x128xf32>
    %4 = vector.broadcast %3 : vector<1x128xf32> to vector<32x128xf32>
    %5 = arith.addf %2, %4 : vector<32x128xf32>
    %c0_5 = arith.constant 0 : index
    %c0_6 = arith.constant 0 : index
    %6 = vector.load %arg4[%c0_5, %c0_6] : memref<32x128xf32, #tpu.memory_space<vmem>>, vector<32x128xf32>
    tpu.vector_store %arg4[%c0_5, %c0_6], %5 {strides = array<i32>} : memref<32x128xf32, #tpu.memory_space<vmem>>, vector<32x128xf32>,
    return
  }
  func.func @transform_0(%arg0: i32) -> (i32, i32) {
    %c0_i32 = arith.constant 0 : i32
    %c0_i32_0 = arith.constant 0 : i32
    return %arg0, %c0_i32 : i32, i32
  }
  func.func @transform_1(%arg0: i32) -> (i32, i32) {
    %c0_i32 = arith.constant 0 : i32
    %c0_i32_0 = arith.constant 0 : i32
    %c0_i32_1 = arith.constant 0 : i32
    return %c0_i32, %c0_i32_0 : i32, i32
  }
  func.func @transform_2(%arg0: i32) -> (i32, i32) {
    %c0_i32 = arith.constant 0 : i32
    %c0_i32_0 = arith.constant 0 : i32
    %c0_i32_1 = arith.constant 0 : i32
    return %c0_i32, %c0_i32_0 : i32, i32
  }
  func.func @transform_3(%arg0: i32) -> (i32, i32) {
    %c0_i32 = arith.constant 0 : i32
    %c0_i32_0 = arith.constant 0 : i32
    return %arg0, %c0_i32 : i32, i32
  }
}

</mosaic_0001>

<llo_original>
// kernel: tpu_custom_call.1
$region0: #{tpu_custom_call.1}
  #allocation0 [shape = 'u32[]', space=smem, size = 0x4, offset = 0x4, fixed_abs, tag = 'smem constant byte address 0x4 - core index']
  #allocation1 [shape = 'u32[144,128]{1,0:T(1,128)}', space=vmem, size = 0x12000, scoped, tag = 'internal scratch']
  %s0 = inlined_call_operand.hbm [shape: bf16[32,32], index: 0, kind: input, shape index: {}]
  %s1 = inlined_call_operand.hbm [shape: bf16[32,128], index: 1, kind: input, shape index: {}]
  %s2 = inlined_call_operand.vmem [shape: f32[1,128], index: 2, kind: input, shape index: {}]
  %s3 = inlined_call_operand.hbm [shape: f32[32,128], index: 3, kind: output, shape index: {}]
  %s4 = sld [smem:[#allocation0]]
  $region30: #{tpu_custom_call.1} parent=0
    _
  %s6 = ssub.s32 1, %s4
  %s7 = scalar_select 0, %s6, %s4
  $region1: #{tpu_custom_call.1} parent=0
    #allocation2 [shape = 'u8[8192]{0}', space=vmem, size = 0x2000, scoped, tag = 'input window, operand 0, single buffered']
    #allocation3 [shape = 's32[1]{0}', space=sflag, size = 0x4, scoped, tag = 'scoped memory for tpu_custom_call.1']
    #allocation4 [shape = 's32[1]{0}', space=sflag, size = 0x4, scoped, tag = 'scoped memory for tpu_custom_call.1']
    #allocation5 [shape = 'u8[8192]{0}', space=vmem, size = 0x2000, scoped, tag = 'input window, operand 1, single buffered']
    #allocation6 [shape = 's32[1]{0}', space=sflag, size = 0x4, scoped, tag = 'scoped memory for tpu_custom_call.1']
    #allocation7 [shape = 'u8[16384]{0}', space=vmem, size = 0x4000, scoped, tag = 'output window, operand 0, single buffered']
    %8 = vsyncpa [#allocation3], 0
    %9 = vsyncpa [#allocation6], 0
    %10 = vsyncpa [#allocation4], 0
    // Predicated region
    $region2: #{tpu_custom_call.1} parent=1 // pred_check
      _
    $region3: #{tpu_custom_call.1} parent=1 // pred_check_branch
      %12 = sbr.rel (0) target = $region5
    $region4: #{tpu_custom_call.1} parent=1 // pred_region
      %s14 = ssub.s32 256, 256
      %15 = vsyncadd [#allocation3], %s14
      %s16 = sshll.u32 [#allocation2], 4
      %s17 = int_to_ptr.vmem [resolvable:$true] %s16
      %22 = dma.hbm_to_vmem [thread:$0]  %s0, 256, %s17, [#allocation3], 64, 64, 4
    $region5: #{tpu_custom_call.1} parent=1 // pred_fallthru
      _
    // Predicated region
    $region6: #{tpu_custom_call.1} parent=1 // pred_check
      _
    $region7: #{tpu_custom_call.1} parent=1 // pred_check_branch
      %24 = sbr.rel (0) target = $region9
    $region8: #{tpu_custom_call.1} parent=1 // pred_region
      %s26 = ssub.s32 256, 256
      %27 = vsyncadd [#allocation6], %s26
      %s28 = sshll.u32 [#allocation5], 4
      %s29 = int_to_ptr.vmem [resolvable:$true] %s28
      %34 = dma.hbm_to_vmem [thread:$0]  %s1, 256, %s29, [#allocation6], 64, 64, 4
    $region9: #{tpu_custom_call.1} parent=1 // pred_fallthru
      _
    // Predicated region
    $region10: #{tpu_custom_call.1} parent=1 // pred_check
      _
    $region11: #{tpu_custom_call.1} parent=1 // pred_check_branch
      %36 = sbr.rel (0) target = $region13
    $region12: #{tpu_custom_call.1} parent=1 // pred_region
      _
    $region13: #{tpu_custom_call.1} parent=1 // pred_fallthru
      _
    // Predicated region
    $region14: #{tpu_custom_call.1} parent=1 // pred_check
      _
    $region15: #{tpu_custom_call.1} parent=1 // pred_check_branch
      %38 = sbr.rel (0) target = $region17
    $region16: #{tpu_custom_call.1} parent=1 // pred_region
      %39 = dma.done [#allocation3], 256
    $region17: #{tpu_custom_call.1} parent=1 // pred_fallthru
      _
    // Predicated region
    $region18: #{tpu_custom_call.1} parent=1 // pred_check
      _
    $region19: #{tpu_custom_call.1} parent=1 // pred_check_branch
      %41 = sbr.rel (0) target = $region21
    $region20: #{tpu_custom_call.1} parent=1 // pred_region
      %42 = dma.done [#allocation6], 256
    $region21: #{tpu_custom_call.1} parent=1 // pred_fallthru
      _
    %v44 = vld [vmem:[#allocation2] sm:$0xf]
    %v45 = vld [vmem:[#allocation2 + $0x4] sm:$0xf]
    %v46 = vld [vmem:[#allocation2 + $0x8] sm:$0xf]
    %v47 = vld [vmem:[#allocation2 + $0xc] sm:$0xf]
    %v48 = vld [vmem:[#allocation5] sm:$0xf]
    %v49 = vld [vmem:[#allocation5 + $0x4] sm:$0xf]
    %v50 = vld [vmem:[#allocation5 + $0x8] sm:$0xf]
    %v51 = vld [vmem:[#allocation5 + $0xc] sm:$0xf]
    %v52 = vld [vmem:[%s2] sm:$0x1]
    %v54 = vlaneseq
    %v55 = vshrl.u32 %v54, 7
    %v56 = vsub.s32 0, %v55
    %v57 = vrot.slane %v52, %v56
    %v63 = vunpack.c.l.b16 %v44
    %v64 = vunpack.c.l.b16 %v45
    %v65 = vunpack.c.l.b16 %v46
    %v66 = vunpack.c.l.b16 %v47
    %v67 = vpack.c.b16 %v64, %v63
    %v68 = vpack.c.b16 %v66, %v65
    %v73 = vunpack.c.l.b16 %v48
    %v74 = vunpack.c.l.b16 %v49
    %v75 = vunpack.c.l.b16 %v50
    %v76 = vunpack.c.l.b16 %v51
    %v77 = vpack.c.b16 %v74, %v73
    %v78 = vpack.c.b16 %v76, %v75
    %vm81 = vcmask 261120
    %v83 = vsel %vm81, %v67, 0
    %v86 = vsel %vm81, %v68, 0
    %88 = vmatprep.subr.bf16.mxu0 0
    %89 = vmatpush1.bf16.msra.mxu0 %v77
    %90 = vmatprep.subr.bf16.mxu0 0
    %91 = vmatpush1.bf16.msra.mxu0 %v78
    %92 = vmatprep.subr.bf16.mxu0 0
    %93 = vmatpush1.bf16.msra.mxu0 0
    %94 = vmatprep.subr.bf16.mxu0 0
    %95 = vmatpush1.bf16.msra.mxu0 0
    %96 = vmatprep.subr.bf16.mxu0 0
    %97 = vmatpush1.bf16.msra.mxu0 0
    %98 = vmatprep.subr.bf16.mxu0 0
    %99 = vmatpush1.bf16.msra.mxu0 0
    %100 = vmatprep.subr.bf16.mxu0 0
    %101 = vmatpush1.bf16.msra.mxu0 0
    %102 = vmatprep.subr.bf16.mxu0 0
    %103 = vmatpush1.bf16.msra.mxu0 0
    %104 = vmatprep.subr.bf16.mxu0 0
    %105 = vmatpush1.bf16.msra.mxu0 0
    %106 = vmatprep.subr.bf16.mxu0 0
    %107 = vmatpush1.bf16.msra.mxu0 0
    %108 = vmatprep.subr.bf16.mxu0 0
    %109 = vmatpush1.bf16.msra.mxu0 0
    %110 = vmatprep.subr.bf16.mxu0 0
    %111 = vmatpush1.bf16.msra.mxu0 0
    %112 = vmatprep.subr.bf16.mxu0 0
    %113 = vmatpush1.bf16.msra.mxu0 0
    %114 = vmatprep.subr.bf16.mxu0 0
    %115 = vmatpush1.bf16.msra.mxu0 0
    %116 = vmatprep.subr.bf16.mxu0 0
    %117 = vmatpush1.bf16.msra.mxu0 0
    %118 = vmatprep.subr.bf16.mxu0 0
    %119 = vmatpush1.bf16.msra.mxu0 0
    %120 = vmatprep.mubr.bf16.mxu0 0
    %121 = vmatmul.mubr.bf16.gmra.mrb[0].mxu0 %v83
    %v122 = vpop.f32.mrb[0].mxu0
    %v123 = vadd.f32 %v57, %v122
    %v124 = vpop.f32.mrb[0].mxu0
    %v125 = vpop.f32.mrb[0].mxu0
    %v126 = vadd.f32 %v57, %v125
    %v127 = vpop.f32.mrb[0].mxu0
    %128 = vmatprep.mubr.bf16.mxu0 0
    %129 = vmatmul.mubr.bf16.gmra.mrb[0].mxu0 %v86
    %v130 = vpop.f32.mrb[0].mxu0
    %v131 = vadd.f32 %v57, %v130
    %v132 = vpop.f32.mrb[0].mxu0
    %v133 = vpop.f32.mrb[0].mxu0
    %v134 = vadd.f32 %v57, %v133
    %v135 = vpop.f32.mrb[0].mxu0
    %136 = vdwg.mxu0
    %137 = vst [vmem:[#allocation7] sm:$0xff] %v123
    %138 = vst [vmem:[#allocation7 + $0x8] sm:$0xff] %v126
    %139 = vst [vmem:[#allocation7 + $0x10] sm:$0xff] %v131
    %140 = vst [vmem:[#allocation7 + $0x18] sm:$0xff] %v134
    // Predicated region
    $region22: #{tpu_custom_call.1} parent=1 // pred_check
      _
    $region23: #{tpu_custom_call.1} parent=1 // pred_check_branch
      %142 = sbr.rel (0) target = $region25
    $region24: #{tpu_custom_call.1} parent=1 // pred_region
      %s144 = ssub.s32 512, 512
      %145 = vsyncadd [#allocation4], %s144
      %s146 = sshll.u32 [#allocation7], 4
      %s147 = int_to_ptr.vmem [resolvable:$true] %s146
      %152 = dma.vmem_to_hbm [thread:$0]  %s147, 512, %s3, [#allocation4], 128, 128, 8
    $region25: #{tpu_custom_call.1} parent=1 // pred_fallthru
      _
    // Predicated region
    $region26: #{tpu_custom_call.1} parent=1 // pred_check
      _
    $region27: #{tpu_custom_call.1} parent=1 // pred_check_branch
      %154 = sbr.rel (0) target = $region29
    $region28: #{tpu_custom_call.1} parent=1 // pred_region
      %155 = dma.done [#allocation4], 512
    $region29: #{tpu_custom_call.1} parent=1 // pred_fallthru
      _
    %156 = vsyncpa [#allocation3], 1
    %157 = vsyncpa [#allocation6], 1
    %158 = vsyncpa [#allocation4], 1

</llo_original>
